<compile_context>
chip_gen: v7x
topology: tpu7x:2x2x1
jax: 0.10.0
libtpu: 0.0.40
codegen_flags: <defaults>
</compile_context>

<pallas_src>
import functools

import jax
import jax.numpy as jnp
from jax.experimental import pallas as pl
from jax.experimental.pallas import tpu as pltpu


_EPS = 1e-12


def _l2_normalize_rsqrt(x, eps=_EPS):
    """x / max(||x||_2, eps) computed as x * rsqrt(max(||x||^2, eps^2)) (EUP path)."""
    sumsq = jnp.sum(x * x, axis=-1, keepdims=True)
    return x * jax.lax.rsqrt(jnp.maximum(sumsq, eps * eps))


def _l2_normalize_ref(x, eps=_EPS):
    """Reference form matching torch.nn.functional.normalize(x, dim=-1)."""
    norm = jnp.sqrt(jnp.sum(x * x, axis=-1, keepdims=True))
    return x / jnp.maximum(norm, eps)


def _adv_sep_fused_kernel(src_idx, tgt_idx, neg_weights, padw, *refs):
    """Fused forward for all decorrelation directions (single invocation, no grid).

    refs layout:
      refs[0 .. F-1] : (B, D)             VMEM  unique raw feature matrices (f32)
      refs[F]        : (D + COLW, COLW)   VMEM  bf16 packed weights:
                                          rows [0, D)        -> W1 blocks side by side
                                          rows [D, D + COLW) -> block-diagonal W2
      refs[F + 1]    : (2, COLW)          VMEM  f32 packed biases (row 0: b1, row 1: b2)
      refs[F + 2]    : (1, 1)             SMEM  combined scalar loss (output)

    COLW = num_dirs * padw; each direction's blocks start at column d * padw.
    All padding is exact zeros: relu(0) = 0 and the padded W2 rows/cols are zero, so
    the padded lanes never contribute to the sliced per-direction outputs.
    """
    num_feats = len(refs) - 3
    feat_refs = refs[:num_feats]
    w_ref = refs[num_feats]
    b_ref = refs[num_feats + 1]
    out_ref = refs[num_feats + 2]

    num_dirs = len(src_idx)
    B, D = feat_refs[0].shape

    # Normalize each unique feature matrix exactly once (f32 VPU/EUP math).
    normed = [_l2_normalize_rsqrt(feat_refs[f][...].astype(jnp.float32))
              for f in range(num_feats)]

    # Stack normalized sources along M and run ONE pair of block-structured GEMMs
    # (bf16 operands, f32 accumulation on the MXU).
    x_src = jnp.concatenate([normed[src_idx[d]] for d in range(num_dirs)], axis=0)
    x_src = x_src.astype(jnp.bfloat16)

    w1 = w_ref[0:D, :]     # (D, COLW)    bf16
    w2 = w_ref[D:, :]      # (COLW, COLW) bf16, block-diagonal
    b1 = b_ref[0:1, :]     # (1, COLW)    f32
    b2 = b_ref[1:2, :]     # (1, COLW)    f32

    h = jnp.dot(x_src, w1, preferred_element_type=jnp.float32) + b1
    h = jnp.maximum(h, 0.0)
    y = jnp.dot(h.astype(jnp.bfloat16), w2, preferred_element_type=jnp.float32) + b2

    # Deferred reduction: one (B, D) f32 accumulator, a single scalar reduce at the end.
    acc = jnp.zeros((B, D), jnp.float32)
    for d in range(num_dirs):                      # static trace-time loop
        y_d = y[d * B:(d + 1) * B, d * padw:d * padw + D]   # tile-aligned static slice
        y_n = _l2_normalize_rsqrt(y_d)
        prod = normed[tgt_idx[d]] * y_n
        acc = acc + jnp.float32(neg_weights[d]) * (prod * prod)

    # mean over last dim then batch == global mean (uniform sizes).
    out_ref[0, 0] = jnp.sum(acc) * jnp.float32(1.0 / (B * D))


@functools.partial(jax.jit,
                   static_argnames=("src_idx", "tgt_idx", "neg_weights", "padw"))
def adversarial_separation_loss(w_packed, b_packed, *feats,
                                src_idx, tgt_idx, neg_weights, padw):
    """Single fused pallas_call computing the full adversarial-separation loss."""
    kernel = functools.partial(_adv_sep_fused_kernel, src_idx, tgt_idx,
                               neg_weights, padw)
    vmem = pl.BlockSpec(memory_space=pltpu.MemorySpace.VMEM)
    smem = pl.BlockSpec(memory_space=pltpu.MemorySpace.SMEM)

    B, D = feats[0].shape
    M = len(src_idx) * B
    colw = int(w_packed.shape[1])
    bytes_in = (sum(int(x.size) * int(x.dtype.itemsize) for x in feats)
                + int(w_packed.size) * int(w_packed.dtype.itemsize)
                + int(b_packed.size) * int(b_packed.dtype.itemsize) + 4)
    cost = pl.CostEstimate(
        flops=int(2 * M * D * colw + 2 * M * colw * colw),
        transcendentals=int((len(feats) + len(src_idx)) * B),
        bytes_accessed=int(bytes_in),
    )

    out = pl.pallas_call(
        kernel,
        out_shape=jax.ShapeDtypeStruct((1, 1), jnp.float32),
        in_specs=[vmem] * (len(feats) + 2),
        out_specs=smem,
        cost_estimate=cost,
    )(*feats, w_packed, b_packed)
    return out[0, 0]


class AdversarialSeparation:
    """JAX/Pallas analogue of the PyTorch `Criterion` module (forward only)."""

    def __init__(self, embed_dim, proj_dim, directions, weights, key):
        self.embed_dim = embed_dim
        self.proj_dim = proj_dim
        self.directions = list(directions)
        self.weights = [float(w) for w in weights]

        # Deterministic ordering of the unique feature keys used by the directions.
        keys = []
        for direction in self.directions:
            for k in direction.split('-'):
                if k not in keys:
                    keys.append(k)
        self.feat_keys = keys
        key_index = {k: i for i, k in enumerate(keys)}
        self.src_idx = tuple(key_index[d.split('-')[0]] for d in self.directions)
        self.tgt_idx = tuple(key_index[d.split('-')[1]] for d in self.directions)
        self.neg_weights = tuple(-w for w in self.weights)   # baked into the trace

        # nn.Linear-style init: U(-1/sqrt(fan_in), 1/sqrt(fan_in)).  Kept in f32 for
        # the references; packed to bf16 for the kernel below.
        self.params = {}
        for direction in self.directions:
            key, k1, k2, k3, k4 = jax.random.split(key, 5)
            bound1 = 1.0 / (embed_dim ** 0.5)
            bound2 = 1.0 / (proj_dim ** 0.5)
            w1 = jax.random.uniform(k1, (embed_dim, proj_dim), jnp.float32, -bound1, bound1)
            b1 = jax.random.uniform(k2, (proj_dim,), jnp.float32, -bound1, bound1)
            w2 = jax.random.uniform(k3, (proj_dim, embed_dim), jnp.float32, -bound2, bound2)
            b2 = jax.random.uniform(k4, (embed_dim,), jnp.float32, -bound2, bound2)
            self.params[direction] = (w1, b1, w2, b2)

        # --- pack all directions into ONE weight buffer + ONE bias buffer ---------
        # Column block d occupies lanes [d*padw, (d+1)*padw); W2 is block-diagonal.
        num_dirs = len(self.directions)
        ppad = ((proj_dim + 127) // 128) * 128
        dpad = ((embed_dim + 127) // 128) * 128
        self.padw = max(ppad, dpad)
        colw = num_dirs * self.padw

        w1_full = jnp.zeros((embed_dim, colw), jnp.float32)
        w2_full = jnp.zeros((colw, colw), jnp.float32)
        b1_full = jnp.zeros((1, colw), jnp.float32)
        b2_full = jnp.zeros((1, colw), jnp.float32)
        for d, direction in enumerate(self.directions):
            w1, b1, w2, b2 = self.params[direction]
            c0 = d * self.padw
            w1_full = w1_full.at[:, c0:c0 + proj_dim].set(w1)
            b1_full = b1_full.at[0, c0:c0 + proj_dim].set(b1)
            w2_full = w2_full.at[c0:c0 + proj_dim, c0:c0 + embed_dim].set(w2)
            b2_full = b2_full.at[0, c0:c0 + embed_dim].set(b2)

        # bf16 matmul operands (f32 MXU accumulation), f32 biases.
        self.w_packed = jnp.concatenate([w1_full, w2_full], axis=0).astype(jnp.bfloat16)
        self.b_packed = jnp.concatenate([b1_full, b2_full], axis=0)

    def __call__(self, feature_dict):
        feats = [jnp.asarray(feature_dict[k], jnp.float32) for k in self.feat_keys]
        return adversarial_separation_loss(
            self.w_packed, self.b_packed, *feats,
            src_idx=self.src_idx, tgt_idx=self.tgt_idx,
            neg_weights=self.neg_weights, padw=self.padw)

    # Pure-JAX f32 reference mirroring the PyTorch forward (sqrt + divide normalize).
    def reference(self, feature_dict):
        adj = {k: _l2_normalize_ref(jnp.asarray(v, jnp.float32))
               for k, v in feature_dict.items()}
        sim_loss = jnp.float32(0.0)
        for weight, direction in zip(self.weights, self.directions):
            source, target = direction.split('-')
            w1, b1, w2, b2 = self.params[direction]
            h = jnp.maximum(adj[source] @ w1 + b1, 0.0)
            y = _l2_normalize_ref(h @ w2 + b2)
            loss_d = jnp.mean(jnp.mean((adj[target] * y) ** 2, axis=-1))
            sim_loss = sim_loss + jnp.float32(-1.0 * weight) * loss_d
        return sim_loss

    # Pure-JAX reference mirroring the kernel's numerics (bf16 matmul operands,
    # f32 accumulation, rsqrt normalization) — for a tight correctness check.
    def reference_kernel_numerics(self, feature_dict):
        adj = {k: _l2_normalize_rsqrt(jnp.asarray(v, jnp.float32))
               for k, v in feature_dict.items()}
        loss = jnp.float32(0.0)
        for weight, direction in zip(self.weights, self.directions):
            source, target = direction.split('-')
            w1, b1, w2, b2 = self.params[direction]
            xs = adj[source].astype(jnp.bfloat16)
            h = jnp.dot(xs, w1.astype(jnp.bfloat16),
                        preferred_element_type=jnp.float32) + b1
            h = jnp.maximum(h, 0.0)
            y = jnp.dot(h.astype(jnp.bfloat16), w2.astype(jnp.bfloat16),
                        preferred_element_type=jnp.float32) + b2
            y_n = _l2_normalize_rsqrt(y)
            loss = loss + jnp.float32(-weight) * jnp.mean((adj[target] * y_n) ** 2)
        return loss


if __name__ == "__main__":
    # Small shapes consistent with the module: batch=8, embed_dim=128, proj_dim=64
    B = 8
    EMBED_DIM = 128
    PROJ_DIM = 64
    DIRECTIONS = ["discriminative-shared", "shared-discriminative"]
    WEIGHTS = [1500.0, 1500.0]  # diva_rho_decorrelation-style weights

    key = jax.random.PRNGKey(0)
    key, kf1, kf2, kparams = jax.random.split(key, 4)

    feature_dict = {
        "discriminative": jax.random.normal(kf1, (B, EMBED_DIM), jnp.float32),
        "shared": jax.random.normal(kf2, (B, EMBED_DIM), jnp.float32),
    }

    criterion = AdversarialSeparation(EMBED_DIM, PROJ_DIM, DIRECTIONS, WEIGHTS, kparams)

    loss = jax.block_until_ready(criterion(feature_dict))

    # Tight check vs. a reference reproducing the kernel's bf16/rsqrt numerics.
    ref_mirror = jax.block_until_ready(criterion.reference_kernel_numerics(feature_dict))
    assert jnp.allclose(loss, ref_mirror, rtol=5e-3, atol=1e-5), (loss, ref_mirror)

    # Looser check vs. the full-f32 PyTorch-equivalent reference (bf16 operand rounding).
    ref_f32 = jax.block_until_ready(criterion.reference(feature_dict))
    assert jnp.allclose(loss, ref_f32, rtol=5e-2, atol=1e-4), (loss, ref_f32)

    print("KERNEL_OK")
</pallas_src>

<mosaic_0001>
module attributes {stable_mosaic.version = 11 : i64} {
  func.func @_adv_sep_fused_kernel(%arg0: memref<8x128xf32, #tpu.memory_space<vmem>>, %arg1: memref<8x128xf32, #tpu.memory_space<vmem>>, %arg2: memref<384x256xbf16, #tpu.memory_space<vmem>>, %arg3: memref<2x256xf32, #tpu.memory_space<vmem>>, %arg4: memref<1x1xf32, #tpu.memory_space<smem>>) attributes {dimension_semantics = [], scalar_prefetch = 0 : i64, scratch_operands = 0 : i64, tpu.core_type = #tpu.core_type<tc>} {
    %c0 = arith.constant 0 : index
    %c0_0 = arith.constant 0 : index
    %0 = vector.load %arg0[%c0, %c0_0] : memref<8x128xf32, #tpu.memory_space<vmem>>, vector<8x128xf32>
    %1 = arith.mulf %0, %0 : vector<8x128xf32>
    %cst = arith.constant dense<0.000000e+00> : vector<8xf32>
    %2 = vector.multi_reduction <add>, %1, %cst [1] : vector<8x128xf32> to vector<8xf32>
    %3 = vector.shape_cast %2 : vector<8xf32> to vector<8x1xf32>
    %cst_1 = arith.constant 1.000000e-24 : f32
    %4 = vector.broadcast %cst_1 : f32 to vector<8x1xf32>
    %5 = arith.maximumf %3, %4 : vector<8x1xf32>
    %6 = math.rsqrt %5 : vector<8x1xf32>
    %7 = vector.broadcast %6 : vector<8x1xf32> to vector<8x128xf32>
    %8 = arith.mulf %0, %7 : vector<8x128xf32>
    %c0_2 = arith.constant 0 : index
    %c0_3 = arith.constant 0 : index
    %9 = vector.load %arg1[%c0_2, %c0_3] : memref<8x128xf32, #tpu.memory_space<vmem>>, vector<8x128xf32>
    %10 = arith.mulf %9, %9 : vector<8x128xf32>
    %cst_4 = arith.constant dense<0.000000e+00> : vector<8xf32>
    %11 = vector.multi_reduction <add>, %10, %cst_4 [1] : vector<8x128xf32> to vector<8xf32>
    %12 = vector.shape_cast %11 : vector<8xf32> to vector<8x1xf32>
    %cst_5 = arith.constant 1.000000e-24 : f32
    %13 = vector.broadcast %cst_5 : f32 to vector<8x1xf32>
    %14 = arith.maximumf %12, %13 : vector<8x1xf32>
    %15 = math.rsqrt %14 : vector<8x1xf32>
    %16 = vector.broadcast %15 : vector<8x1xf32> to vector<8x128xf32>
    %17 = arith.mulf %9, %16 : vector<8x128xf32>
    %18 = tpu.concatenate %8, %17 in 0 : vector<8x128xf32>, vector<8x128xf32> -> vector<16x128xf32>
    %19 = arith.truncf %18 : vector<16x128xf32> to vector<16x128xbf16>
    %c0_6 = arith.constant 0 : index
    %c0_7 = arith.constant 0 : index
    %20 = vector.load %arg2[%c0_6, %c0_7] : memref<384x256xbf16, #tpu.memory_space<vmem>>, vector<128x256xbf16>
    %c128 = arith.constant 128 : index
    %c0_8 = arith.constant 0 : index
    %21 = vector.load %arg2[%c128, %c0_8] : memref<384x256xbf16, #tpu.memory_space<vmem>>, vector<256x256xbf16>
    %c0_9 = arith.constant 0 : index
    %c0_10 = arith.constant 0 : index
    %22 = vector.load %arg3[%c0_9, %c0_10] : memref<2x256xf32, #tpu.memory_space<vmem>>, vector<1x256xf32>
    %c1 = arith.constant 1 : index
    %c0_11 = arith.constant 0 : index
    %23 = vector.load %arg3[%c1, %c0_11] : memref<2x256xf32, #tpu.memory_space<vmem>>, vector<1x256xf32>
    %cst_12 = arith.constant dense<0.000000e+00> : vector<16x256xf32>
    %24 = tpu.matmul %19, %20, %cst_12 {dimension_numbers = #tpu.dot_dimension_numbers<[1], [0], [0], [1], [0, 0, 1, 1], [], []>} : vector<16x128xbf16>, vector<128x256xbf16>, vector<16x256xf32> -> vector<16x256xf32>
    %25 = vector.broadcast %22 : vector<1x256xf32> to vector<16x256xf32>
    %26 = arith.addf %24, %25 : vector<16x256xf32>
    %cst_13 = arith.constant 0.000000e+00 : f32
    %27 = vector.broadcast %cst_13 : f32 to vector<16x256xf32>
    %28 = arith.maximumf %26, %27 : vector<16x256xf32>
    %29 = arith.truncf %28 : vector<16x256xf32> to vector<16x256xbf16>
    %cst_14 = arith.constant dense<0.000000e+00> : vector<16x256xf32>
    %30 = tpu.matmul %29, %21, %cst_14 {dimension_numbers = #tpu.dot_dimension_numbers<[1], [0], [0], [1], [0, 0, 1, 1], [], []>} : vector<16x256xbf16>, vector<256x256xbf16>, vector<16x256xf32> -> vector<16x256xf32>
    %31 = vector.broadcast %23 : vector<1x256xf32> to vector<16x256xf32>
    %32 = arith.addf %30, %31 : vector<16x256xf32>
    %cst_15 = arith.constant 0.000000e+00 : f32
    %33 = vector.broadcast %cst_15 : f32 to vector<8x128xf32>
    %34 = vector.extract_strided_slice %32 {offsets = [0, 0], sizes = [8, 128], strides = [1, 1]} : vector<16x256xf32> to vector<8x128xf32>
    %35 = arith.mulf %34, %34 : vector<8x128xf32>
    %cst_16 = arith.constant dense<0.000000e+00> : vector<8xf32>
    %36 = vector.multi_reduction <add>, %35, %cst_16 [1] : vector<8x128xf32> to vector<8xf32>
    %37 = vector.shape_cast %36 : vector<8xf32> to vector<8x1xf32>
    %cst_17 = arith.constant 1.000000e-24 : f32
    %38 = vector.broadcast %cst_17 : f32 to vector<8x1xf32>
    %39 = arith.maximumf %37, %38 : vector<8x1xf32>
    %40 = math.rsqrt %39 : vector<8x1xf32>
    %41 = vector.broadcast %40 : vector<8x1xf32> to vector<8x128xf32>
    %42 = arith.mulf %34, %41 : vector<8x128xf32>
    %43 = arith.mulf %17, %42 : vector<8x128xf32>
    %44 = arith.mulf %43, %43 : vector<8x128xf32>
    %cst_18 = arith.constant -1.500000e+03 : f32
    %45 = vector.broadcast %cst_18 : f32 to vector<8x128xf32>
    %46 = arith.mulf %45, %44 : vector<8x128xf32>
    %47 = arith.addf %33, %46 : vector<8x128xf32>
    %48 = vector.extract_strided_slice %32 {offsets = [8, 128], sizes = [8, 128], strides = [1, 1]} : vector<16x256xf32> to vector<8x128xf32>
    %49 = arith.mulf %48, %48 : vector<8x128xf32>
    %cst_19 = arith.constant dense<0.000000e+00> : vector<8xf32>
    %50 = vector.multi_reduction <add>, %49, %cst_19 [1] : vector<8x128xf32> to vector<8xf32>
    %51 = vector.shape_cast %50 : vector<8xf32> to vector<8x1xf32>
    %cst_20 = arith.constant 1.000000e-24 : f32
    %52 = vector.broadcast %cst_20 : f32 to vector<8x1xf32>
    %53 = arith.maximumf %51, %52 : vector<8x1xf32>
    %54 = math.rsqrt %53 : vector<8x1xf32>
    %55 = vector.broadcast %54 : vector<8x1xf32> to vector<8x128xf32>
    %56 = arith.mulf %48, %55 : vector<8x128xf32>
    %57 = arith.mulf %8, %56 : vector<8x128xf32>
    %58 = arith.mulf %57, %57 : vector<8x128xf32>
    %cst_21 = arith.constant -1.500000e+03 : f32
    %59 = vector.broadcast %cst_21 : f32 to vector<8x128xf32>
    %60 = arith.mulf %59, %58 : vector<8x128xf32>
    %61 = arith.addf %47, %60 : vector<8x128xf32>
    %62 = vector.shape_cast %61 : vector<8x128xf32> to vector<1x8x128xf32>
    %cst_22 = arith.constant dense<0.000000e+00> : vector<1xf32>
    %63 = vector.multi_reduction <add>, %62, %cst_22 [1, 2] : vector<1x8x128xf32> to vector<1xf32>
    %64 = vector.shape_cast %63 : vector<1xf32> to vector<1x1x1xf32>
    %65 = vector.extract %64[0, 0, 0] : f32 from vector<1x1x1xf32>
    %cst_23 = arith.constant 9.765625E-4 : f32
    %66 = arith.mulf %65, %cst_23 : f32
    %c0_24 = arith.constant 0 : index
    %c0_25 = arith.constant 0 : index
    %67 = memref.load %arg4[%c0_24, %c0_25] : memref<1x1xf32, #tpu.memory_space<smem>>
    memref.store %66, %arg4[%c0_24, %c0_25] : memref<1x1xf32, #tpu.memory_space<smem>>
    return
  }
}

</mosaic_0001>

<llo_original>
// kernel: adversarial_separation_loss.1
$region0: #{adversarial_separation_loss.1}
  #allocation0 [shape = 'u32[]', space=smem, size = 0x4, offset = 0x4, fixed_abs, tag = 'smem constant byte address 0x4 - core index']
  #allocation1 [shape = 'u32[144,128]{1,0:T(1,128)}', space=vmem, size = 0x12000, scoped, tag = 'internal scratch']
  %s0 = inlined_call_operand.hbm [shape: f32[8,128], index: 0, kind: input, shape index: {}]
  %s1 = inlined_call_operand.vmem [shape: f32[8,128], index: 1, kind: input, shape index: {}]
  %s2 = inlined_call_operand.hbm [shape: bf16[384,256], index: 2, kind: input, shape index: {}]
  %s3 = inlined_call_operand.hbm [shape: f32[2,256], index: 3, kind: input, shape index: {}]
  %s4 = inlined_call_operand.hbm [shape: f32[1,1], index: 4, kind: output, shape index: {}]
  %s5 = sld [smem:[#allocation0]]
  $region38: #{adversarial_separation_loss.1} parent=0
    _
  %s7 = ssub.s32 1, %s5
  %s8 = scalar_select 0, %s7, %s5
  $region1: #{adversarial_separation_loss.1} parent=0
    #allocation2 [shape = 'u8[4096]{0}', space=vmem, size = 0x1000, scoped, tag = 'input window, operand 0, single buffered']
    #allocation3 [shape = 's32[1]{0}', space=sflag, size = 0x4, scoped, tag = 'scoped memory for adversarial_separation_loss.1']
    #allocation4 [shape = 's32[1]{0}', space=sflag, size = 0x4, scoped, tag = 'scoped memory for adversarial_separation_loss.1']
    #allocation5 [shape = 'u8[196608]{0}', space=vmem, size = 0x30000, scoped, tag = 'input window, operand 2, single buffered']
    #allocation6 [shape = 's32[1]{0}', space=sflag, size = 0x4, scoped, tag = 'scoped memory for adversarial_separation_loss.1']
    #allocation7 [shape = 'u8[2048]{0}', space=vmem, size = 0x800, scoped, tag = 'input window, operand 3, single buffered']
    #allocation8 [shape = 'u8[512]{0}', space=smem, size = 0x200, scoped, tag = 'output window, operand 0, single buffered']
    %9 = vsyncpa [#allocation3], 0
    %10 = vsyncpa [#allocation6], 0
    %11 = vsyncpa [#allocation4], 0
    // Predicated region
    $region2: #{adversarial_separation_loss.1} parent=1 // pred_check
      _
    $region3: #{adversarial_separation_loss.1} parent=1 // pred_check_branch
      %13 = sbr.rel (0) target = $region5
    $region4: #{adversarial_separation_loss.1} parent=1 // pred_region
      %s15 = ssub.s32 128, 128
      %16 = vsyncadd [#allocation3], %s15
      %s18 = sshll.u32 [#allocation2], 4
      %s19 = int_to_ptr.vmem [resolvable:$true] %s18
      %21 = dma.hbm_to_vmem [thread:$0]  %s0, 128, %s19, [#allocation3]
    $region5: #{adversarial_separation_loss.1} parent=1 // pred_fallthru
      _
    // Predicated region
    $region6: #{adversarial_separation_loss.1} parent=1 // pred_check
      _
    $region7: #{adversarial_separation_loss.1} parent=1 // pred_check_branch
      %23 = sbr.rel (0) target = $region9
    $region8: #{adversarial_separation_loss.1} parent=1 // pred_region
      _
    $region9: #{adversarial_separation_loss.1} parent=1 // pred_fallthru
      _
    // Predicated region
    $region10: #{adversarial_separation_loss.1} parent=1 // pred_check
      _
    $region11: #{adversarial_separation_loss.1} parent=1 // pred_check_branch
      %25 = sbr.rel (0) target = $region13
    $region12: #{adversarial_separation_loss.1} parent=1 // pred_region
      %s27 = ssub.s32 6144, 6144
      %28 = vsyncadd [#allocation6], %s27
      %s29 = sshll.u32 [#allocation5], 4
      %s30 = int_to_ptr.vmem [resolvable:$true] %s29
      %35 = dma.hbm_to_vmem [thread:$0]  %s2, 6144, %s30, [#allocation6], 128, 128, 8
    $region13: #{adversarial_separation_loss.1} parent=1 // pred_fallthru
      _
    // Predicated region
    $region14: #{adversarial_separation_loss.1} parent=1 // pred_check
      _
    $region15: #{adversarial_separation_loss.1} parent=1 // pred_check_branch
      %37 = sbr.rel (0) target = $region17
    $region16: #{adversarial_separation_loss.1} parent=1 // pred_region
      %s39 = ssub.s32 64, 64
      %40 = vsyncadd [#allocation6], %s39
      %s42 = sshll.u32 [#allocation7], 4
      %s43 = int_to_ptr.vmem [resolvable:$true] %s42
      %45 = dma.hbm_to_vmem [thread:$0]  %s3, 64, %s43, [#allocation6]
    $region17: #{adversarial_separation_loss.1} parent=1 // pred_fallthru
      _
    // Predicated region
    $region18: #{adversarial_separation_loss.1} parent=1 // pred_check
      _
    $region19: #{adversarial_separation_loss.1} parent=1 // pred_check_branch
      %47 = sbr.rel (0) target = $region21
    $region20: #{adversarial_separation_loss.1} parent=1 // pred_region
      %48 = dma.done [#allocation3], 128
    $region21: #{adversarial_separation_loss.1} parent=1 // pred_fallthru
      _
    // Predicated region
    $region22: #{adversarial_separation_loss.1} parent=1 // pred_check
      _
    $region23: #{adversarial_separation_loss.1} parent=1 // pred_check_branch
      %50 = sbr.rel (0) target = $region25
    $region24: #{adversarial_separation_loss.1} parent=1 // pred_region
      %51 = dma.done [#allocation6], 6144
    $region25: #{adversarial_separation_loss.1} parent=1 // pred_fallthru
      _
    // Predicated region
    $region26: #{adversarial_separation_loss.1} parent=1 // pred_check
      _
    $region27: #{adversarial_separation_loss.1} parent=1 // pred_check_branch
      %53 = sbr.rel (0) target = $region29
    $region28: #{adversarial_separation_loss.1} parent=1 // pred_region
      %54 = dma.done [#allocation6], 64
    $region29: #{adversarial_separation_loss.1} parent=1 // pred_fallthru
      _
    %v56 = vld [vmem:[#allocation2] sm:$0xff]
    %v57 = vmul.f32 %v56, %v56
    %58 = vadd.xlane.f32.xlu0 %v57
    %v59 = vpop.xlane.xlu0 %58
    %v60 = vmax.f32 %v59, 1e-24
    %v61 = vrsqrt.pop %v60
    %v62 = vmul.f32 %v56, %v61
    %v63 = vld [vmem:[%s1] sm:$0xff]
    %v64 = vmul.f32 %v63, %v63
    %65 = vadd.xlane.f32.xlu0 %v64
    %v66 = vpop.xlane.xlu0 %65
    %v67 = vmax.f32 %v66, 1e-24
    %v68 = vrsqrt.pop %v67
    %v69 = vmul.f32 %v63, %v68
    %v70 = vpack.c.bf16 %v69, %v62
    %v71 = vld [vmem:[#allocation5] sm:$0xff]
    %v72 = vld [vmem:[#allocation5 + $0x8] sm:$0xff]
    %v73 = vld [vmem:[#allocation5 + $0x10] sm:$0xff]
    %v74 = vld [vmem:[#allocation5 + $0x18] sm:$0xff]
    %v75 = vld [vmem:[#allocation5 + $0x20] sm:$0xff]
    %v76 = vld [vmem:[#allocation5 + $0x28] sm:$0xff]
    %v77 = vld [vmem:[#allocation5 + $0x30] sm:$0xff]
    %v78 = vld [vmem:[#allocation5 + $0x38] sm:$0xff]
    %v79 = vld [vmem:[#allocation5 + $0x40] sm:$0xff]
    %v80 = vld [vmem:[#allocation5 + $0x48] sm:$0xff]
    %v81 = vld [vmem:[#allocation5 + $0x50] sm:$0xff]
    %v82 = vld [vmem:[#allocation5 + $0x58] sm:$0xff]
    %v83 = vld [vmem:[#allocation5 + $0x60] sm:$0xff]
    %v84 = vld [vmem:[#allocation5 + $0x68] sm:$0xff]
    %v85 = vld [vmem:[#allocation5 + $0x70] sm:$0xff]
    %v86 = vld [vmem:[#allocation5 + $0x78] sm:$0xff]
    %v87 = vld [vmem:[#allocation5 + $0x80] sm:$0xff]
    %v88 = vld [vmem:[#allocation5 + $0x88] sm:$0xff]
    %v89 = vld [vmem:[#allocation5 + $0x90] sm:$0xff]
    %v90 = vld [vmem:[#allocation5 + $0x98] sm:$0xff]
    %v91 = vld [vmem:[#allocation5 + $0xa0] sm:$0xff]
    %v92 = vld [vmem:[#allocation5 + $0xa8] sm:$0xff]
    %v93 = vld [vmem:[#allocation5 + $0xb0] sm:$0xff]
    %v94 = vld [vmem:[#allocation5 + $0xb8] sm:$0xff]
    %v95 = vld [vmem:[#allocation5 + $0xc0] sm:$0xff]
    %v96 = vld [vmem:[#allocation5 + $0xc8] sm:$0xff]
    %v97 = vld [vmem:[#allocation5 + $0xd0] sm:$0xff]
    %v98 = vld [vmem:[#allocation5 + $0xd8] sm:$0xff]
    %v99 = vld [vmem:[#allocation5 + $0xe0] sm:$0xff]
    %v100 = vld [vmem:[#allocation5 + $0xe8] sm:$0xff]
    %v101 = vld [vmem:[#allocation5 + $0xf0] sm:$0xff]
    %v102 = vld [vmem:[#allocation5 + $0xf8] sm:$0xff]
    %v103 = vld [vmem:[#allocation5 + $0x100] sm:$0xff]
    %v104 = vld [vmem:[#allocation5 + $0x108] sm:$0xff]
    %v105 = vld [vmem:[#allocation5 + $0x110] sm:$0xff]
    %v106 = vld [vmem:[#allocation5 + $0x118] sm:$0xff]
    %v107 = vld [vmem:[#allocation5 + $0x120] sm:$0xff]
    %v108 = vld [vmem:[#allocation5 + $0x128] sm:$0xff]
    %v109 = vld [vmem:[#allocation5 + $0x130] sm:$0xff]
    %v110 = vld [vmem:[#allocation5 + $0x138] sm:$0xff]
    %v111 = vld [vmem:[#allocation5 + $0x140] sm:$0xff]
    %v112 = vld [vmem:[#allocation5 + $0x148] sm:$0xff]
    %v113 = vld [vmem:[#allocation5 + $0x150] sm:$0xff]
    %v114 = vld [vmem:[#allocation5 + $0x158] sm:$0xff]
    %v115 = vld [vmem:[#allocation5 + $0x160] sm:$0xff]
    %v116 = vld [vmem:[#allocation5 + $0x168] sm:$0xff]
    %v117 = vld [vmem:[#allocation5 + $0x170] sm:$0xff]
    %v118 = vld [vmem:[#allocation5 + $0x178] sm:$0xff]
    %v119 = vld [vmem:[#allocation7] ss:$2 sm:$0x3]
    %s120 = scalar_lea.vmem [#allocation7], 1
    %v121 = vld [vmem:[%s120] ss:$2 sm:$0x3]
    %v123 = vlaneseq
    %v124 = vshrl.u32 %v123, 7
    %v125 = vsub.s32 0, %v124
    %v126 = vrot.slane %v119, %v125
    %v127 = vlaneseq
    %v128 = vshrl.u32 %v127, 7
    %v129 = vsub.s32 1, %v128
    %v130 = vrot.slane %v119, %v129
    %v149 = vunpack.c.l.b16 %v71
    %v150 = vunpack.c.h.b16 %v71
    %v151 = vunpack.c.l.b16 %v72
    %v152 = vunpack.c.h.b16 %v72
    %v153 = vunpack.c.l.b16 %v73
    %v154 = vunpack.c.h.b16 %v73
    %v155 = vunpack.c.l.b16 %v74
    %v156 = vunpack.c.h.b16 %v74
    %v157 = vunpack.c.l.b16 %v75
    %v158 = vunpack.c.h.b16 %v75
    %v159 = vunpack.c.l.b16 %v76
    %v160 = vunpack.c.h.b16 %v76
    %v161 = vunpack.c.l.b16 %v77
    %v162 = vunpack.c.h.b16 %v77
    %v163 = vunpack.c.l.b16 %v78
    %v164 = vunpack.c.h.b16 %v78
    %v165 = vunpack.c.l.b16 %v79
    %v166 = vunpack.c.h.b16 %v79
    %v167 = vunpack.c.l.b16 %v80
    %v168 = vunpack.c.h.b16 %v80
    %v169 = vunpack.c.l.b16 %v81
    %v170 = vunpack.c.h.b16 %v81
    %v171 = vunpack.c.l.b16 %v82
    %v172 = vunpack.c.h.b16 %v82
    %v173 = vunpack.c.l.b16 %v83
    %v174 = vunpack.c.h.b16 %v83
    %v175 = vunpack.c.l.b16 %v84
    %v176 = vunpack.c.h.b16 %v84
    %v177 = vunpack.c.l.b16 %v85
    %v178 = vunpack.c.h.b16 %v85
    %v179 = vunpack.c.l.b16 %v86
    %v180 = vunpack.c.h.b16 %v86
    %v181 = vpack.c.b16 %v151, %v149
    %v182 = vpack.c.b16 %v152, %v150
    %v183 = vpack.c.b16 %v155, %v153
    %v184 = vpack.c.b16 %v156, %v154
    %v185 = vpack.c.b16 %v159, %v157
    %v186 = vpack.c.b16 %v160, %v158
    %v187 = vpack.c.b16 %v163, %v161
    %v188 = vpack.c.b16 %v164, %v162
    %v189 = vpack.c.b16 %v167, %v165
    %v190 = vpack.c.b16 %v168, %v166
    %v191 = vpack.c.b16 %v171, %v169
    %v192 = vpack.c.b16 %v172, %v170
    %v193 = vpack.c.b16 %v175, %v173
    %v194 = vpack.c.b16 %v176, %v174
    %v195 = vpack.c.b16 %v179, %v177
    %v196 = vpack.c.b16 %v180, %v178
    %213 = vmatprep.subr.bf16.mxu0 %v182
    %214 = vmatpush1.bf16.msra.mxu0 %v181
    %215 = vmatprep.subr.bf16.mxu0 %v184
    %216 = vmatpush1.bf16.msra.mxu0 %v183
    %217 = vmatprep.subr.bf16.mxu0 %v186
    %218 = vmatpush1.bf16.msra.mxu0 %v185
    %219 = vmatprep.subr.bf16.mxu0 %v188
    %220 = vmatpush1.bf16.msra.mxu0 %v187
    %221 = vmatprep.subr.bf16.mxu0 %v190
    %222 = vmatpush1.bf16.msra.mxu0 %v189
    %223 = vmatprep.subr.bf16.mxu0 %v192
    %224 = vmatpush1.bf16.msra.mxu0 %v191
    %225 = vmatprep.subr.bf16.mxu0 %v194
    %226 = vmatpush1.bf16.msra.mxu0 %v193
    %227 = vmatprep.subr.bf16.mxu0 %v196
    %228 = vmatpush1.bf16.msra.mxu0 %v195
    %229 = vmatprep.subr.bf16.mxu0 0
    %230 = vmatpush1.bf16.msra.mxu0 0
    %231 = vmatprep.subr.bf16.mxu0 0
    %232 = vmatpush1.bf16.msra.mxu0 0
    %233 = vmatprep.subr.bf16.mxu0 0
    %234 = vmatpush1.bf16.msra.mxu0 0
    %235 = vmatprep.subr.bf16.mxu0 0
    %236 = vmatpush1.bf16.msra.mxu0 0
    %237 = vmatprep.subr.bf16.mxu0 0
    %238 = vmatpush1.bf16.msra.mxu0 0
    %239 = vmatprep.subr.bf16.mxu0 0
    %240 = vmatpush1.bf16.msra.mxu0 0
    %241 = vmatprep.subr.bf16.mxu0 0
    %242 = vmatpush1.bf16.msra.mxu0 0
    %243 = vmatprep.subr.bf16.mxu0 0
    %244 = vmatpush1.bf16.msra.mxu0 0
    %245 = vmatprep.mubr.bf16.mxu0 0
    %246 = vmatmul.mubr.bf16.gmra.mrb[0].mxu0 %v70
    %v247 = vpop.f32.mrb[0].mxu0
    %v248 = vadd.f32 %v126, %v247
    %v249 = vpop.f32.mrb[0].mxu0
    %v250 = vadd.f32 %v130, %v249
    %v251 = vpop.f32.mrb[0].mxu0
    %v252 = vadd.f32 %v126, %v251
    %v253 = vpop.f32.mrb[0].mxu0
    %v254 = vadd.f32 %v130, %v253
    %255 = vdwg.mxu0
    %v256 = vmax.f32 %v248, 0.0
    %v257 = vmax.f32 %v250, 0.0
    %v258 = vmax.f32 %v252, 0.0
    %v259 = vmax.f32 %v254, 0.0
    %v260 = vpack.c.bf16 %v258, %v256
    %v261 = vpack.c.bf16 %v259, %v257
    %v263 = vlaneseq
    %v264 = vshrl.u32 %v263, 7
    %v265 = vsub.s32 0, %v264
    %v266 = vrot.slane %v121, %v265
    %v267 = vlaneseq
    %v268 = vshrl.u32 %v267, 7
    %v269 = vsub.s32 1, %v268
    %v270 = vrot.slane %v121, %v269
    %v305 = vunpack.c.l.b16 %v87
    %v306 = vunpack.c.h.b16 %v87
    %v307 = vunpack.c.l.b16 %v88
    %v308 = vunpack.c.h.b16 %v88
    %v309 = vunpack.c.l.b16 %v89
    %v310 = vunpack.c.h.b16 %v89
    %v311 = vunpack.c.l.b16 %v90
    %v312 = vunpack.c.h.b16 %v90
    %v313 = vunpack.c.l.b16 %v91
    %v314 = vunpack.c.h.b16 %v91
    %v315 = vunpack.c.l.b16 %v92
    %v316 = vunpack.c.h.b16 %v92
    %v317 = vunpack.c.l.b16 %v93
    %v318 = vunpack.c.h.b16 %v93
    %v319 = vunpack.c.l.b16 %v94
    %v320 = vunpack.c.h.b16 %v94
    %v321 = vunpack.c.l.b16 %v95
    %v322 = vunpack.c.h.b16 %v95
    %v323 = vunpack.c.l.b16 %v96
    %v324 = vunpack.c.h.b16 %v96
    %v325 = vunpack.c.l.b16 %v97
    %v326 = vunpack.c.h.b16 %v97
    %v327 = vunpack.c.l.b16 %v98
    %v328 = vunpack.c.h.b16 %v98
    %v329 = vunpack.c.l.b16 %v99
    %v330 = vunpack.c.h.b16 %v99
    %v331 = vunpack.c.l.b16 %v100
    %v332 = vunpack.c.h.b16 %v100
    %v333 = vunpack.c.l.b16 %v101
    %v334 = vunpack.c.h.b16 %v101
    %v335 = vunpack.c.l.b16 %v102
    %v336 = vunpack.c.h.b16 %v102
    %v337 = vunpack.c.l.b16 %v103
    %v338 = vunpack.c.h.b16 %v103
    %v339 = vunpack.c.l.b16 %v104
    %v340 = vunpack.c.h.b16 %v104
    %v341 = vunpack.c.l.b16 %v105
    %v342 = vunpack.c.h.b16 %v105
    %v343 = vunpack.c.l.b16 %v106
    %v344 = vunpack.c.h.b16 %v106
    %v345 = vunpack.c.l.b16 %v107
    %v346 = vunpack.c.h.b16 %v107
    %v347 = vunpack.c.l.b16 %v108
    %v348 = vunpack.c.h.b16 %v108
    %v349 = vunpack.c.l.b16 %v109
    %v350 = vunpack.c.h.b16 %v109
    %v351 = vunpack.c.l.b16 %v110
    %v352 = vunpack.c.h.b16 %v110
    %v353 = vunpack.c.l.b16 %v111
    %v354 = vunpack.c.h.b16 %v111
    %v355 = vunpack.c.l.b16 %v112
    %v356 = vunpack.c.h.b16 %v112
    %v357 = vunpack.c.l.b16 %v113
    %v358 = vunpack.c.h.b16 %v113
    %v359 = vunpack.c.l.b16 %v114
    %v360 = vunpack.c.h.b16 %v114
    %v361 = vunpack.c.l.b16 %v115
    %v362 = vunpack.c.h.b16 %v115
    %v363 = vunpack.c.l.b16 %v116
    %v364 = vunpack.c.h.b16 %v116
    %v365 = vunpack.c.l.b16 %v117
    %v366 = vunpack.c.h.b16 %v117
    %v367 = vunpack.c.l.b16 %v118
    %v368 = vunpack.c.h.b16 %v118
    %v369 = vpack.c.b16 %v307, %v305
    %v370 = vpack.c.b16 %v308, %v306
    %v371 = vpack.c.b16 %v311, %v309
    %v372 = vpack.c.b16 %v312, %v310
    %v373 = vpack.c.b16 %v315, %v313
    %v374 = vpack.c.b16 %v316, %v314
    %v375 = vpack.c.b16 %v319, %v317
    %v376 = vpack.c.b16 %v320, %v318
    %v377 = vpack.c.b16 %v323, %v321
    %v378 = vpack.c.b16 %v324, %v322
    %v379 = vpack.c.b16 %v327, %v325
    %v380 = vpack.c.b16 %v328, %v326
    %v381 = vpack.c.b16 %v331, %v329
    %v382 = vpack.c.b16 %v332, %v330
    %v383 = vpack.c.b16 %v335, %v333
    %v384 = vpack.c.b16 %v336, %v334
    %v385 = vpack.c.b16 %v339, %v337
    %v386 = vpack.c.b16 %v340, %v338
    %v387 = vpack.c.b16 %v343, %v341
    %v388 = vpack.c.b16 %v344, %v342
    %v389 = vpack.c.b16 %v347, %v345
    %v390 = vpack.c.b16 %v348, %v346
    %v391 = vpack.c.b16 %v351, %v349
    %v392 = vpack.c.b16 %v352, %v350
    %v393 = vpack.c.b16 %v355, %v353
    %v394 = vpack.c.b16 %v356, %v354
    %v395 = vpack.c.b16 %v359, %v357
    %v396 = vpack.c.b16 %v360, %v358
    %v397 = vpack.c.b16 %v363, %v361
    %v398 = vpack.c.b16 %v364, %v362
    %v399 = vpack.c.b16 %v367, %v365
    %v400 = vpack.c.b16 %v368, %v366
    %433 = vmatprep.subr.bf16.mxu0 %v370
    %434 = vmatpush1.bf16.msra.mxu0 %v369
    %435 = vmatprep.subr.bf16.mxu0 %v372
    %436 = vmatpush1.bf16.msra.mxu0 %v371
    %437 = vmatprep.subr.bf16.mxu0 %v374
    %438 = vmatpush1.bf16.msra.mxu0 %v373
    %439 = vmatprep.subr.bf16.mxu0 %v376
    %440 = vmatpush1.bf16.msra.mxu0 %v375
    %441 = vmatprep.subr.bf16.mxu0 %v378
    %442 = vmatpush1.bf16.msra.mxu0 %v377
    %443 = vmatprep.subr.bf16.mxu0 %v380
    %444 = vmatpush1.bf16.msra.mxu0 %v379
    %445 = vmatprep.subr.bf16.mxu0 %v382
    %446 = vmatpush1.bf16.msra.mxu0 %v381
    %447 = vmatprep.subr.bf16.mxu0 %v384
    %448 = vmatpush1.bf16.msra.mxu0 %v383
    %449 = vmatprep.subr.bf16.mxu0 %v386
    %450 = vmatpush1.bf16.msra.mxu0 %v385
    %451 = vmatprep.subr.bf16.mxu0 %v388
    %452 = vmatpush1.bf16.msra.mxu0 %v387
    %453 = vmatprep.subr.bf16.mxu0 %v390
    %454 = vmatpush1.bf16.msra.mxu0 %v389
    %455 = vmatprep.subr.bf16.mxu0 %v392
    %456 = vmatpush1.bf16.msra.mxu0 %v391
    %457 = vmatprep.subr.bf16.mxu0 %v394
    %458 = vmatpush1.bf16.msra.mxu0 %v393
    %459 = vmatprep.subr.bf16.mxu0 %v396
    %460 = vmatpush1.bf16.msra.mxu0 %v395
    %461 = vmatprep.subr.bf16.mxu0 %v398
    %462 = vmatpush1.bf16.msra.mxu0 %v397
    %463 = vmatprep.subr.bf16.mxu0 %v400
    %464 = vmatpush1.bf16.msra.mxu0 %v399
    %465 = vmatprep.mubr.bf16.mxu0 %v261
    %466 = vmatmul.mubr.bf16.gmra.mrb[0].mxu0 %v260
    %v467 = vpop.f32.mrb[0].mxu0
    %v468 = vadd.f32 %v266, %v467
    %v469 = vpop.f32.mrb[0].mxu0
    %v470 = vpop.f32.mrb[0].mxu0
    %v471 = vpop.f32.mrb[0].mxu0
    %v472 = vadd.f32 %v270, %v471
    %473 = vdwg.mxu0
    %v474 = vmul.f32 %v468, %v468
    %475 = vadd.xlane.f32.xlu0 %v474
    %v476 = vpop.xlane.xlu0 %475
    %v477 = vmax.f32 %v476, 1e-24
    %v478 = vrsqrt.pop %v477
    %v479 = vmul.f32 %v468, %v478
    %v480 = vmul.f32 %v69, %v479
    %v481 = vmul.f32 %v480, %v480
    %v482 = vmul.f32 %v481, -1500.0
    %v483 = vadd.f32 %v482, 0.0
    %v484 = vmul.f32 %v472, %v472
    %485 = vadd.xlane.f32.xlu0 %v484
    %v486 = vpop.xlane.xlu0 %485
    %v487 = vmax.f32 %v486, 1e-24
    %v488 = vrsqrt.pop %v487
    %v489 = vmul.f32 %v472, %v488
    %v490 = vmul.f32 %v62, %v489
    %v491 = vmul.f32 %v490, %v490
    %v492 = vmul.f32 %v491, -1500.0
    %v493 = vadd.f32 %v483, %v492
    %494 = vadd.xlane.f32.xlu0 %v493
    %v495 = vpop.xlane.xlu0 %494
    %v496 = vrot.slane %v495, 4
    %v497 = vadd.f32 %v495, %v496
    %v498 = vrot.slane %v497, 2
    %v499 = vadd.f32 %v497, %v498
    %v500 = vrot.slane %v499, 1
    %v501 = vadd.f32 %v499, %v500
    %s502 = vtos %v501
    %s503 = smul.f32 %s502, 0.0009765625
    %s504 = scalar_lea.smem [#allocation8], 0
    %505 = sst [smem:[%s504]] %s503
    // Predicated region
    $region30: #{adversarial_separation_loss.1} parent=1 // pred_check
      _
    $region31: #{adversarial_separation_loss.1} parent=1 // pred_check_branch
      %507 = sbr.rel (0) target = $region33
    $region32: #{adversarial_separation_loss.1} parent=1 // pred_region
      %s509 = ssub.s32 16, 16
      %510 = vsyncadd [#allocation4], %s509
      %513 = dma.smem_to_hbm [#allocation8], 16, %s4, [#allocation4]
    $region33: #{adversarial_separation_loss.1} parent=1 // pred_fallthru
      _
    // Predicated region
    $region34: #{adversarial_separation_loss.1} parent=1 // pred_check
      _
    $region35: #{adversarial_separation_loss.1} parent=1 // pred_check_branch
      %515 = sbr.rel (0) target = $region37
    $region36: #{adversarial_separation_loss.1} parent=1 // pred_region
      %516 = dma.done [#allocation4], 16
    $region37: #{adversarial_separation_loss.1} parent=1 // pred_fallthru
      _
    %517 = sfence
    %518 = vsyncpa [#allocation3], 1
    %519 = vsyncpa [#allocation6], 1
    %520 = vsyncpa [#allocation4], 1

</llo_original>
